<compile_context>
chip_gen: v7x
topology: tpu7x:2x2x1
jax: 0.10.0
libtpu: 0.0.40
codegen_flags: <defaults>
</compile_context>

<pallas_src>
import math

import jax
import jax.numpy as jnp
import numpy as np
from jax.experimental import pallas as pl
from jax.experimental.pallas import tpu as pltpu

# Module hyper-parameters (YOLO_V1_Loss.__init__ defaults)
S = 7
B = 2
CLASSES = 20
L_COORD = 5.0
L_NOOBJ = 0.5
IMG_SIZE = 448.0
GRID_SIZE = 64.0

C_PRED = B * 5 + CLASSES          # 30
C_GT = 10 + CLASSES               # 30

# Largest cells-per-block tile.  ~4K cells keeps the double-buffered input
# blocks (2 inputs x 2 buffers x TILE x 128-lane-padded x 4B ~= 8 MiB) well
# inside the default scoped-VMEM limit on every generation (incl. v7x's
# 64 MiB physical VMEM) while amortizing the ~0.35us per-grid-step overhead
# and keeping vreg spill pressure from the (1, TILE) temporaries moderate.
MAX_TILE = 4096


def _round_up(x, m):
    return (x + m - 1) // m * m


def _pick_tile(n_pad, max_tile):
    """Largest multiple of 8 that divides n_pad and is <= max_tile."""
    m = n_pad // 8
    best = 1
    for d in range(1, min(m, max_tile // 8) + 1):
        if m % d == 0:
            best = d
    return best * 8


def _trunc(x):
    # Python int() truncates toward zero.
    return jnp.where(x >= 0.0, jnp.floor(x), jnp.ceil(x))


def _make_kernel(tile_n):
    cells_per_img = float(S * S)

    def kernel(pred_ref, gt_ref, out_ref):
        # (TILE_N, C) natural layout -> (C, TILE_N) channel-major (in-kernel
        # transpose, hidden under the pipelined input DMA).
        pred = jnp.transpose(pred_ref[...])    # (30, TILE_N)
        gt = jnp.transpose(gt_ref[...])        # (30, TILE_N)

        # grid_x / grid_y from the global cell index (no grid input stream).
        # f32 index math is exact for < 2^24 total cells; the fix-up below
        # absorbs any rounding of the first floor-divide.
        lane = jax.lax.broadcasted_iota(jnp.int32, (1, tile_n), 1)
        idx = lane.astype(jnp.float32) + (
            pl.program_id(0) * tile_n).astype(jnp.float32)
        img = jnp.floor(idx / cells_per_img)
        cell = idx - img * cells_per_img
        cell = jnp.where(cell < 0.0, cell + cells_per_img, cell)
        cell = jnp.where(cell >= cells_per_img, cell - cells_per_img, cell)
        row = jnp.floor(cell / float(S))
        col = cell - row * float(S)
        grid_x = col * GRID_SIZE              # indexCol * 64
        grid_y = row * GRID_SIZE              # indexRow * 64

        gx1 = gt[5:6, :]
        gy1 = gt[6:7, :]
        gx2 = gt[7:8, :]
        gy2 = gt[8:9, :]
        g_area = (gx2 - gx1) * (gy2 - gy1)

        def box_iou(bx, by, bw, bh):
            px = _trunc(grid_x + bx * GRID_SIZE)
            py = _trunc(grid_y + by * GRID_SIZE)
            pw = _trunc(bw * IMG_SIZE)
            ph = _trunc(bh * IMG_SIZE)
            x1 = jnp.maximum(0.0, px - pw * 0.5)
            y1 = jnp.maximum(0.0, py - ph * 0.5)
            x2 = jnp.minimum(IMG_SIZE - 1.0, px + pw * 0.5)
            y2 = jnp.minimum(IMG_SIZE - 1.0, py + ph * 0.5)
            p_area = (x2 - x1) * (y2 - y1)
            lx = jnp.maximum(x1, gx1)
            rx = jnp.minimum(x2, gx2)
            uy = jnp.maximum(y1, gy1)
            dy = jnp.minimum(y2, gy2)
            inter = (rx - lx) * (dy - uy)
            denom = p_area + g_area - inter
            empty = jnp.logical_or(rx < lx, dy < uy)
            safe_denom = jnp.where(empty, 1.0, denom)
            return jnp.where(empty, 0.0, inter / safe_denom)

        p1 = pred[0:5, :]             # (5, TILE_N)
        p2 = pred[5:10, :]            # (5, TILE_N)
        p_cls = pred[10:, :]          # (Classes, TILE_N)

        iou1 = box_iou(p1[0:1, :], p1[1:2, :], p1[2:3, :], p1[3:4, :])
        iou2 = box_iou(p2[0:1, :], p2[1:2, :], p2[2:3, :], p2[3:4, :])

        use_one = iou1 > iou2                              # (1, TILE_N)
        pb = jnp.where(use_one, p1, p2)                    # responsible box
        best_iou = jnp.where(use_one, iou1, iou2)
        no_conf = jnp.where(use_one, p2[4:5, :], p1[4:5, :])

        eps = 1e-08
        coord_term = L_COORD * (
            (gt[0:1, :] - pb[0:1, :]) ** 2
            + (gt[1:2, :] - pb[1:2, :]) ** 2
            + (jnp.sqrt(gt[2:3, :] + eps) - jnp.sqrt(pb[2:3, :] + eps)) ** 2
            + (jnp.sqrt(gt[3:4, :] + eps) - jnp.sqrt(pb[3:4, :] + eps)) ** 2
        )
        conf_obj_term = (pb[4:5, :] - best_iou) ** 2
        cls_term = jnp.mean((gt[10:, :] - p_cls) ** 2, axis=0, keepdims=True)
        noobj_penalty = L_NOOBJ * no_conf ** 2             # goes into loss only

        obj_flag = jnp.round(gt[9:10, :]) != 0.0           # (1, TILE_N)

        c1 = p1[4:5, :]
        c2 = p2[4:5, :]
        # NOTE: faithful to the PyTorch code, the second term is NOT scaled by l_noobj.
        noobj_loss = L_NOOBJ * c1 ** 2 + c2 ** 2

        obj_loss = coord_term + conf_obj_term + cls_term + noobj_penalty

        zero = jnp.zeros_like(best_iou)
        loss_row = jnp.where(obj_flag, obj_loss, noobj_loss)
        coord_row = jnp.where(obj_flag, coord_term, zero)
        # NOTE: faithful bug-for-bug: loss_confidence uses no_conf**2 WITHOUT l_noobj.
        conf_row = jnp.where(obj_flag, conf_obj_term + no_conf ** 2, noobj_loss)
        cls_row = jnp.where(obj_flag, cls_term, zero)
        iou_row = jnp.where(obj_flag, best_iou, zero)
        num_row = obj_flag.astype(jnp.float32)

        # One (8, TILE_N) stack -> single cross-lane reduction -> one
        # lane-dense (8, 128) partial-sum tile per block.
        stacked = jnp.concatenate(
            [loss_row, coord_row, conf_row, cls_row, iou_row, num_row,
             zero, zero], axis=0)                            # (8, TILE_N)
        sums = jnp.sum(stacked, axis=1, keepdims=True)       # (8, 1)
        out_ref[0] = jnp.broadcast_to(sums, (8, 128))

    return kernel


def yolo_v1_loss(bounding_boxes, ground_truth, *, max_tile=MAX_TILE):
    """bounding_boxes: [batch, S, S, B*5+Classes]; ground_truth: [batch, S, S, 10+Classes]."""
    batch = bounding_boxes.shape[0]
    n_cells = batch * S * S

    # Free metadata reshape (no host-side transpose / no extra HBM pass).
    pred2d = bounding_boxes.reshape(n_cells, C_PRED).astype(jnp.float32)
    gt2d = ground_truth.reshape(n_cells, C_GT).astype(jnp.float32)

    # Pad the cell count to a multiple of 8 so a sublane-aligned tile always
    # exists.  Zero-padded cells are "no object" cells with zero predictions
    # and contribute exactly 0 to every loss term.
    n_pad = _round_up(n_cells, 8)
    if n_pad != n_cells:
        pad = n_pad - n_cells
        pred2d = jnp.pad(pred2d, ((0, pad), (0, 0)))
        gt2d = jnp.pad(gt2d, ((0, pad), (0, 0)))

    tile = _pick_tile(n_pad, max_tile)
    num_blocks = n_pad // tile

    partials = pl.pallas_call(
        _make_kernel(tile),
        out_shape=jax.ShapeDtypeStruct((num_blocks, 8, 128), jnp.float32),
        grid=(num_blocks,),
        in_specs=[
            pl.BlockSpec((tile, C_PRED), lambda i: (i, 0)),
            pl.BlockSpec((tile, C_GT), lambda i: (i, 0)),
        ],
        out_specs=pl.BlockSpec((1, 8, 128), lambda i: (i, 0, 0)),
        compiler_params=pltpu.CompilerParams(
            dimension_semantics=("parallel",)),
    )(pred2d, gt2d)

    totals = jnp.sum(partials[:, :, 0], axis=0)     # (8,) -> first 6 used
    return (totals[0], totals[1], totals[2], totals[3], totals[4], totals[5])


# ----------------------------------------------------------------------------
# Pure python/numpy reference, replicating the PyTorch loops exactly.
# ----------------------------------------------------------------------------
def _reference(bb, gt):
    bb = np.asarray(bb, dtype=np.float64)
    gt = np.asarray(gt, dtype=np.float64)

    def iou(box, gbox, grid_x, grid_y, img_size=448, grid_size=64):
        pb = [int(grid_x + box[0] * grid_size), int(grid_y + box[1] * grid_size),
              int(box[2] * img_size), int(box[3] * img_size)]
        pc = [max(0, pb[0] - pb[2] / 2), max(0, pb[1] - pb[3] / 2),
              min(img_size - 1, pb[0] + pb[2] / 2), min(img_size - 1, pb[1] + pb[3] / 2)]
        p_area = (pc[2] - pc[0]) * (pc[3] - pc[1])
        gc = [gbox[5], gbox[6], gbox[7], gbox[8]]
        g_area = (gc[2] - gc[0]) * (gc[3] - gc[1])
        lx = max(pc[0], gc[0]); rx = min(pc[2], gc[2])
        uy = max(pc[1], gc[1]); dy = min(pc[3], gc[3])
        if rx < lx or dy < uy:
            return 0.0
        inter = (rx - lx) * (dy - uy)
        return inter / (p_area + g_area - inter)

    loss = lc = lconf = lcls = ious = 0.0
    onum = 0
    for b in range(bb.shape[0]):
        for r in range(S):
            for c in range(S):
                box = bb[b, r, c]
                gbox = gt[b, r, c]
                p1, p2 = box[0:5], box[5:10]
                if round(float(gbox[9])) == 0:
                    val = L_NOOBJ * p1[4] ** 2 + p2[4] ** 2
                    loss += val; lconf += val
                else:
                    onum += 1
                    i1 = iou(p1, gbox, c * 64, r * 64)
                    i2 = iou(p2, gbox, c * 64, r * 64)
                    if i1 > i2:
                        pb_, ii, npb = p1, i1, p2
                    else:
                        pb_, ii, npb = p2, i2, p1
                    ct = L_COORD * ((gbox[0] - pb_[0]) ** 2 + (gbox[1] - pb_[1]) ** 2 +
                                    (math.sqrt(gbox[2] + 1e-08) - math.sqrt(pb_[2] + 1e-08)) ** 2 +
                                    (math.sqrt(gbox[3] + 1e-08) - math.sqrt(pb_[3] + 1e-08)) ** 2)
                    loss += ct; lc += ct
                    loss += (pb_[4] - ii) ** 2
                    lconf += (pb_[4] - ii) ** 2
                    ious += ii
                    ce = float(np.mean((gbox[10:] - box[10:]) ** 2))
                    loss += ce; lcls += ce
                    loss += L_NOOBJ * npb[4] ** 2
                    lconf += npb[4] ** 2
    return loss, lc, lconf, lcls, ious, onum


if __name__ == "__main__":
    batch = 2
    key = jax.random.PRNGKey(0)
    k1, k2, k3, k4, k5, k6, k7 = jax.random.split(key, 7)

    # Predictions (e.g. post-sigmoid network output), all in [0, 1).
    bounding_boxes = jax.random.uniform(k1, (batch, S, S, B * 5 + CLASSES),
                                        dtype=jnp.float32)

    # Ground truth: [xc, yc, w, h, 1, x1, y1, x2, y2, obj, class...(20)]
    gt_xywh = jax.random.uniform(k2, (batch, S, S, 4), dtype=jnp.float32)
    obj = (jax.random.uniform(k3, (batch, S, S, 1)) < 0.4).astype(jnp.float32)
    cx = jax.random.uniform(k4, (batch, S, S, 1), minval=50.0, maxval=400.0)
    cy = jax.random.uniform(k5, (batch, S, S, 1), minval=50.0, maxval=400.0)
    wh = jax.random.uniform(k6, (batch, S, S, 2), minval=20.0, maxval=150.0)
    x1 = jnp.clip(cx - wh[..., 0:1] / 2, 0.0, IMG_SIZE - 1.0)
    y1 = jnp.clip(cy - wh[..., 1:2] / 2, 0.0, IMG_SIZE - 1.0)
    x2 = jnp.clip(cx + wh[..., 0:1] / 2, 0.0, IMG_SIZE - 1.0)
    y2 = jnp.clip(cy + wh[..., 1:2] / 2, 0.0, IMG_SIZE - 1.0)
    gt_classes = jax.random.uniform(k7, (batch, S, S, CLASSES), dtype=jnp.float32)
    ground_truth = jnp.concatenate(
        [gt_xywh, jnp.ones((batch, S, S, 1), jnp.float32),
         x1, y1, x2, y2, obj, gt_classes], axis=-1).astype(jnp.float32)

    outs = yolo_v1_loss(bounding_boxes, ground_truth)
    outs = jax.block_until_ready(outs)
    loss, loss_coord, loss_conf, loss_cls, iou_sum, obj_num = (
        float(outs[0]), float(outs[1]), float(outs[2]), float(outs[3]),
        float(outs[4]), int(round(float(outs[5]))))

    ref = _reference(bounding_boxes, ground_truth)
    np.testing.assert_allclose(
        np.array([loss, loss_coord, loss_conf, loss_cls, iou_sum]),
        np.array(ref[:5]), rtol=1e-3, atol=1e-3)
    assert obj_num == ref[5]

    print("KERNEL_OK")
</pallas_src>

<mosaic_0001>
module attributes {stable_mosaic.version = 11 : i64} {
  func.func @kernel(%arg0: i32, %arg1: memref<104x30xf32, #tpu.memory_space<vmem>>, %arg2: memref<104x30xf32, #tpu.memory_space<vmem>>, %arg3: memref<1x8x128xf32, #tpu.memory_space<vmem>>) attributes {dimension_semantics = [#tpu.dimension_semantics<parallel>], iteration_bounds = array<i64: 1>, scalar_prefetch = 0 : i64, scratch_operands = 0 : i64, tpu.core_type = #tpu.core_type<tc>, window_params = [{transform_indices = @transform_0, window_bounds = array<i64: 104, 30>}, {transform_indices = @transform_1, window_bounds = array<i64: 104, 30>}, {transform_indices = @transform_2, window_bounds = array<i64: 1, 8, 128>}]} {
    %c0 = arith.constant 0 : index
    %c0_0 = arith.constant 0 : index
    %0 = vector.load %arg1[%c0, %c0_0] : memref<104x30xf32, #tpu.memory_space<vmem>>, vector<104x30xf32>
    %1 = tpu.transpose %0, [1, 0] : vector<104x30xf32> -> vector<30x104xf32>
    %c0_1 = arith.constant 0 : index
    %c0_2 = arith.constant 0 : index
    %2 = vector.load %arg2[%c0_1, %c0_2] : memref<104x30xf32, #tpu.memory_space<vmem>>, vector<104x30xf32>
    %3 = tpu.transpose %2, [1, 0] : vector<104x30xf32> -> vector<30x104xf32>
    %4 = tpu.iota {dimensions = array<i32: 1>} : vector<1x104xi32>
    %5 = arith.sitofp %4 : vector<1x104xi32> to vector<1x104xf32>
    %c104_i32 = arith.constant 104 : i32
    %6 = arith.muli %arg0, %c104_i32 : i32
    %7 = arith.sitofp %6 : i32 to f32
    %8 = vector.broadcast %7 : f32 to vector<1x104xf32>
    %9 = arith.addf %5, %8 : vector<1x104xf32>
    %cst = arith.constant 4.900000e+01 : f32
    %10 = vector.broadcast %cst : f32 to vector<1x104xf32>
    %11 = arith.divf %9, %10 : vector<1x104xf32>
    %12 = math.floor %11 : vector<1x104xf32>
    %cst_3 = arith.constant 4.900000e+01 : f32
    %13 = vector.broadcast %cst_3 : f32 to vector<1x104xf32>
    %14 = arith.mulf %12, %13 : vector<1x104xf32>
    %15 = arith.subf %9, %14 : vector<1x104xf32>
    %cst_4 = arith.constant 0.000000e+00 : f32
    %16 = vector.broadcast %cst_4 : f32 to vector<1x104xf32>
    %17 = arith.cmpf olt, %15, %16 : vector<1x104xf32>
    %cst_5 = arith.constant 4.900000e+01 : f32
    %18 = vector.broadcast %cst_5 : f32 to vector<1x104xf32>
    %19 = arith.addf %15, %18 : vector<1x104xf32>
    %20 = arith.select %17, %19, %15 : vector<1x104xi1>, vector<1x104xf32>
    %cst_6 = arith.constant 4.900000e+01 : f32
    %21 = vector.broadcast %cst_6 : f32 to vector<1x104xf32>
    %22 = arith.cmpf oge, %20, %21 : vector<1x104xf32>
    %cst_7 = arith.constant 4.900000e+01 : f32
    %23 = vector.broadcast %cst_7 : f32 to vector<1x104xf32>
    %24 = arith.subf %20, %23 : vector<1x104xf32>
    %25 = arith.select %22, %24, %20 : vector<1x104xi1>, vector<1x104xf32>
    %cst_8 = arith.constant 7.000000e+00 : f32
    %26 = vector.broadcast %cst_8 : f32 to vector<1x104xf32>
    %27 = arith.divf %25, %26 : vector<1x104xf32>
    %28 = math.floor %27 : vector<1x104xf32>
    %cst_9 = arith.constant 7.000000e+00 : f32
    %29 = vector.broadcast %cst_9 : f32 to vector<1x104xf32>
    %30 = arith.mulf %28, %29 : vector<1x104xf32>
    %31 = arith.subf %25, %30 : vector<1x104xf32>
    %cst_10 = arith.constant 6.400000e+01 : f32
    %32 = vector.broadcast %cst_10 : f32 to vector<1x104xf32>
    %33 = arith.mulf %31, %32 : vector<1x104xf32>
    %cst_11 = arith.constant 6.400000e+01 : f32
    %34 = vector.broadcast %cst_11 : f32 to vector<1x104xf32>
    %35 = arith.mulf %28, %34 : vector<1x104xf32>
    %36 = vector.extract_strided_slice %3 {offsets = [5, 0], sizes = [1, 104], strides = [1, 1]} : vector<30x104xf32> to vector<1x104xf32>
    %37 = vector.extract_strided_slice %3 {offsets = [6, 0], sizes = [1, 104], strides = [1, 1]} : vector<30x104xf32> to vector<1x104xf32>
    %38 = vector.extract_strided_slice %3 {offsets = [7, 0], sizes = [1, 104], strides = [1, 1]} : vector<30x104xf32> to vector<1x104xf32>
    %39 = vector.extract_strided_slice %3 {offsets = [8, 0], sizes = [1, 104], strides = [1, 1]} : vector<30x104xf32> to vector<1x104xf32>
    %40 = arith.subf %38, %36 : vector<1x104xf32>
    %41 = arith.subf %39, %37 : vector<1x104xf32>
    %42 = arith.mulf %40, %41 : vector<1x104xf32>
    %43 = vector.extract_strided_slice %1 {offsets = [0, 0], sizes = [5, 104], strides = [1, 1]} : vector<30x104xf32> to vector<5x104xf32>
    %44 = vector.extract_strided_slice %1 {offsets = [5, 0], sizes = [5, 104], strides = [1, 1]} : vector<30x104xf32> to vector<5x104xf32>
    %45 = vector.extract_strided_slice %1 {offsets = [10, 0], sizes = [20, 104], strides = [1, 1]} : vector<30x104xf32> to vector<20x104xf32>
    %46 = vector.extract_strided_slice %43 {offsets = [0, 0], sizes = [1, 104], strides = [1, 1]} : vector<5x104xf32> to vector<1x104xf32>
    %47 = vector.extract_strided_slice %43 {offsets = [1, 0], sizes = [1, 104], strides = [1, 1]} : vector<5x104xf32> to vector<1x104xf32>
    %48 = vector.extract_strided_slice %43 {offsets = [2, 0], sizes = [1, 104], strides = [1, 1]} : vector<5x104xf32> to vector<1x104xf32>
    %49 = vector.extract_strided_slice %43 {offsets = [3, 0], sizes = [1, 104], strides = [1, 1]} : vector<5x104xf32> to vector<1x104xf32>
    %cst_12 = arith.constant 6.400000e+01 : f32
    %50 = vector.broadcast %cst_12 : f32 to vector<1x104xf32>
    %51 = arith.mulf %46, %50 : vector<1x104xf32>
    %52 = arith.addf %33, %51 : vector<1x104xf32>
    %cst_13 = arith.constant 0.000000e+00 : f32
    %53 = vector.broadcast %cst_13 : f32 to vector<1x104xf32>
    %54 = arith.cmpf oge, %52, %53 : vector<1x104xf32>
    %55 = math.floor %52 : vector<1x104xf32>
    %56 = math.ceil %52 : vector<1x104xf32>
    %57 = arith.select %54, %55, %56 : vector<1x104xi1>, vector<1x104xf32>
    %cst_14 = arith.constant 6.400000e+01 : f32
    %58 = vector.broadcast %cst_14 : f32 to vector<1x104xf32>
    %59 = arith.mulf %47, %58 : vector<1x104xf32>
    %60 = arith.addf %35, %59 : vector<1x104xf32>
    %cst_15 = arith.constant 0.000000e+00 : f32
    %61 = vector.broadcast %cst_15 : f32 to vector<1x104xf32>
    %62 = arith.cmpf oge, %60, %61 : vector<1x104xf32>
    %63 = math.floor %60 : vector<1x104xf32>
    %64 = math.ceil %60 : vector<1x104xf32>
    %65 = arith.select %62, %63, %64 : vector<1x104xi1>, vector<1x104xf32>
    %cst_16 = arith.constant 4.480000e+02 : f32
    %66 = vector.broadcast %cst_16 : f32 to vector<1x104xf32>
    %67 = arith.mulf %48, %66 : vector<1x104xf32>
    %cst_17 = arith.constant 0.000000e+00 : f32
    %68 = vector.broadcast %cst_17 : f32 to vector<1x104xf32>
    %69 = arith.cmpf oge, %67, %68 : vector<1x104xf32>
    %70 = math.floor %67 : vector<1x104xf32>
    %71 = math.ceil %67 : vector<1x104xf32>
    %72 = arith.select %69, %70, %71 : vector<1x104xi1>, vector<1x104xf32>
    %cst_18 = arith.constant 4.480000e+02 : f32
    %73 = vector.broadcast %cst_18 : f32 to vector<1x104xf32>
    %74 = arith.mulf %49, %73 : vector<1x104xf32>
    %cst_19 = arith.constant 0.000000e+00 : f32
    %75 = vector.broadcast %cst_19 : f32 to vector<1x104xf32>
    %76 = arith.cmpf oge, %74, %75 : vector<1x104xf32>
    %77 = math.floor %74 : vector<1x104xf32>
    %78 = math.ceil %74 : vector<1x104xf32>
    %79 = arith.select %76, %77, %78 : vector<1x104xi1>, vector<1x104xf32>
    %cst_20 = arith.constant 5.000000e-01 : f32
    %80 = vector.broadcast %cst_20 : f32 to vector<1x104xf32>
    %81 = arith.mulf %72, %80 : vector<1x104xf32>
    %82 = arith.subf %57, %81 : vector<1x104xf32>
    %cst_21 = arith.constant 0.000000e+00 : f32
    %83 = vector.broadcast %cst_21 : f32 to vector<1x104xf32>
    %84 = arith.maximumf %83, %82 : vector<1x104xf32>
    %cst_22 = arith.constant 5.000000e-01 : f32
    %85 = vector.broadcast %cst_22 : f32 to vector<1x104xf32>
    %86 = arith.mulf %79, %85 : vector<1x104xf32>
    %87 = arith.subf %65, %86 : vector<1x104xf32>
    %cst_23 = arith.constant 0.000000e+00 : f32
    %88 = vector.broadcast %cst_23 : f32 to vector<1x104xf32>
    %89 = arith.maximumf %88, %87 : vector<1x104xf32>
    %cst_24 = arith.constant 5.000000e-01 : f32
    %90 = vector.broadcast %cst_24 : f32 to vector<1x104xf32>
    %91 = arith.mulf %72, %90 : vector<1x104xf32>
    %92 = arith.addf %57, %91 : vector<1x104xf32>
    %cst_25 = arith.constant 4.470000e+02 : f32
    %93 = vector.broadcast %cst_25 : f32 to vector<1x104xf32>
    %94 = arith.minimumf %93, %92 : vector<1x104xf32>
    %cst_26 = arith.constant 5.000000e-01 : f32
    %95 = vector.broadcast %cst_26 : f32 to vector<1x104xf32>
    %96 = arith.mulf %79, %95 : vector<1x104xf32>
    %97 = arith.addf %65, %96 : vector<1x104xf32>
    %cst_27 = arith.constant 4.470000e+02 : f32
    %98 = vector.broadcast %cst_27 : f32 to vector<1x104xf32>
    %99 = arith.minimumf %98, %97 : vector<1x104xf32>
    %100 = arith.subf %94, %84 : vector<1x104xf32>
    %101 = arith.subf %99, %89 : vector<1x104xf32>
    %102 = arith.mulf %100, %101 : vector<1x104xf32>
    %103 = arith.maximumf %84, %36 : vector<1x104xf32>
    %104 = arith.minimumf %94, %38 : vector<1x104xf32>
    %105 = arith.maximumf %89, %37 : vector<1x104xf32>
    %106 = arith.minimumf %99, %39 : vector<1x104xf32>
    %107 = arith.subf %104, %103 : vector<1x104xf32>
    %108 = arith.subf %106, %105 : vector<1x104xf32>
    %109 = arith.mulf %107, %108 : vector<1x104xf32>
    %110 = arith.addf %102, %42 : vector<1x104xf32>
    %111 = arith.subf %110, %109 : vector<1x104xf32>
    %112 = arith.cmpf olt, %104, %103 : vector<1x104xf32>
    %113 = arith.cmpf olt, %106, %105 : vector<1x104xf32>
    %114 = arith.ori %112, %113 : vector<1x104xi1>
    %cst_28 = arith.constant 1.000000e+00 : f32
    %115 = vector.broadcast %cst_28 : f32 to vector<1x104xf32>
    %116 = arith.select %114, %115, %111 : vector<1x104xi1>, vector<1x104xf32>
    %117 = arith.divf %109, %116 : vector<1x104xf32>
    %cst_29 = arith.constant 0.000000e+00 : f32
    %118 = vector.broadcast %cst_29 : f32 to vector<1x104xf32>
    %119 = arith.select %114, %118, %117 : vector<1x104xi1>, vector<1x104xf32>
    %120 = vector.extract_strided_slice %44 {offsets = [0, 0], sizes = [1, 104], strides = [1, 1]} : vector<5x104xf32> to vector<1x104xf32>
    %121 = vector.extract_strided_slice %44 {offsets = [1, 0], sizes = [1, 104], strides = [1, 1]} : vector<5x104xf32> to vector<1x104xf32>
    %122 = vector.extract_strided_slice %44 {offsets = [2, 0], sizes = [1, 104], strides = [1, 1]} : vector<5x104xf32> to vector<1x104xf32>
    %123 = vector.extract_strided_slice %44 {offsets = [3, 0], sizes = [1, 104], strides = [1, 1]} : vector<5x104xf32> to vector<1x104xf32>
    %cst_30 = arith.constant 6.400000e+01 : f32
    %124 = vector.broadcast %cst_30 : f32 to vector<1x104xf32>
    %125 = arith.mulf %120, %124 : vector<1x104xf32>
    %126 = arith.addf %33, %125 : vector<1x104xf32>
    %cst_31 = arith.constant 0.000000e+00 : f32
    %127 = vector.broadcast %cst_31 : f32 to vector<1x104xf32>
    %128 = arith.cmpf oge, %126, %127 : vector<1x104xf32>
    %129 = math.floor %126 : vector<1x104xf32>
    %130 = math.ceil %126 : vector<1x104xf32>
    %131 = arith.select %128, %129, %130 : vector<1x104xi1>, vector<1x104xf32>
    %cst_32 = arith.constant 6.400000e+01 : f32
    %132 = vector.broadcast %cst_32 : f32 to vector<1x104xf32>
    %133 = arith.mulf %121, %132 : vector<1x104xf32>
    %134 = arith.addf %35, %133 : vector<1x104xf32>
    %cst_33 = arith.constant 0.000000e+00 : f32
    %135 = vector.broadcast %cst_33 : f32 to vector<1x104xf32>
    %136 = arith.cmpf oge, %134, %135 : vector<1x104xf32>
    %137 = math.floor %134 : vector<1x104xf32>
    %138 = math.ceil %134 : vector<1x104xf32>
    %139 = arith.select %136, %137, %138 : vector<1x104xi1>, vector<1x104xf32>
    %cst_34 = arith.constant 4.480000e+02 : f32
    %140 = vector.broadcast %cst_34 : f32 to vector<1x104xf32>
    %141 = arith.mulf %122, %140 : vector<1x104xf32>
    %cst_35 = arith.constant 0.000000e+00 : f32
    %142 = vector.broadcast %cst_35 : f32 to vector<1x104xf32>
    %143 = arith.cmpf oge, %141, %142 : vector<1x104xf32>
    %144 = math.floor %141 : vector<1x104xf32>
    %145 = math.ceil %141 : vector<1x104xf32>
    %146 = arith.select %143, %144, %145 : vector<1x104xi1>, vector<1x104xf32>
    %cst_36 = arith.constant 4.480000e+02 : f32
    %147 = vector.broadcast %cst_36 : f32 to vector<1x104xf32>
    %148 = arith.mulf %123, %147 : vector<1x104xf32>
    %cst_37 = arith.constant 0.000000e+00 : f32
    %149 = vector.broadcast %cst_37 : f32 to vector<1x104xf32>
    %150 = arith.cmpf oge, %148, %149 : vector<1x104xf32>
    %151 = math.floor %148 : vector<1x104xf32>
    %152 = math.ceil %148 : vector<1x104xf32>
    %153 = arith.select %150, %151, %152 : vector<1x104xi1>, vector<1x104xf32>
    %cst_38 = arith.constant 5.000000e-01 : f32
    %154 = vector.broadcast %cst_38 : f32 to vector<1x104xf32>
    %155 = arith.mulf %146, %154 : vector<1x104xf32>
    %156 = arith.subf %131, %155 : vector<1x104xf32>
    %cst_39 = arith.constant 0.000000e+00 : f32
    %157 = vector.broadcast %cst_39 : f32 to vector<1x104xf32>
    %158 = arith.maximumf %157, %156 : vector<1x104xf32>
    %cst_40 = arith.constant 5.000000e-01 : f32
    %159 = vector.broadcast %cst_40 : f32 to vector<1x104xf32>
    %160 = arith.mulf %153, %159 : vector<1x104xf32>
    %161 = arith.subf %139, %160 : vector<1x104xf32>
    %cst_41 = arith.constant 0.000000e+00 : f32
    %162 = vector.broadcast %cst_41 : f32 to vector<1x104xf32>
    %163 = arith.maximumf %162, %161 : vector<1x104xf32>
    %cst_42 = arith.constant 5.000000e-01 : f32
    %164 = vector.broadcast %cst_42 : f32 to vector<1x104xf32>
    %165 = arith.mulf %146, %164 : vector<1x104xf32>
    %166 = arith.addf %131, %165 : vector<1x104xf32>
    %cst_43 = arith.constant 4.470000e+02 : f32
    %167 = vector.broadcast %cst_43 : f32 to vector<1x104xf32>
    %168 = arith.minimumf %167, %166 : vector<1x104xf32>
    %cst_44 = arith.constant 5.000000e-01 : f32
    %169 = vector.broadcast %cst_44 : f32 to vector<1x104xf32>
    %170 = arith.mulf %153, %169 : vector<1x104xf32>
    %171 = arith.addf %139, %170 : vector<1x104xf32>
    %cst_45 = arith.constant 4.470000e+02 : f32
    %172 = vector.broadcast %cst_45 : f32 to vector<1x104xf32>
    %173 = arith.minimumf %172, %171 : vector<1x104xf32>
    %174 = arith.subf %168, %158 : vector<1x104xf32>
    %175 = arith.subf %173, %163 : vector<1x104xf32>
    %176 = arith.mulf %174, %175 : vector<1x104xf32>
    %177 = arith.maximumf %158, %36 : vector<1x104xf32>
    %178 = arith.minimumf %168, %38 : vector<1x104xf32>
    %179 = arith.maximumf %163, %37 : vector<1x104xf32>
    %180 = arith.minimumf %173, %39 : vector<1x104xf32>
    %181 = arith.subf %178, %177 : vector<1x104xf32>
    %182 = arith.subf %180, %179 : vector<1x104xf32>
    %183 = arith.mulf %181, %182 : vector<1x104xf32>
    %184 = arith.addf %176, %42 : vector<1x104xf32>
    %185 = arith.subf %184, %183 : vector<1x104xf32>
    %186 = arith.cmpf olt, %178, %177 : vector<1x104xf32>
    %187 = arith.cmpf olt, %180, %179 : vector<1x104xf32>
    %188 = arith.ori %186, %187 : vector<1x104xi1>
    %cst_46 = arith.constant 1.000000e+00 : f32
    %189 = vector.broadcast %cst_46 : f32 to vector<1x104xf32>
    %190 = arith.select %188, %189, %185 : vector<1x104xi1>, vector<1x104xf32>
    %191 = arith.divf %183, %190 : vector<1x104xf32>
    %cst_47 = arith.constant 0.000000e+00 : f32
    %192 = vector.broadcast %cst_47 : f32 to vector<1x104xf32>
    %193 = arith.select %188, %192, %191 : vector<1x104xi1>, vector<1x104xf32>
    %194 = arith.cmpf ogt, %119, %193 : vector<1x104xf32>
    %195 = vector.shape_cast %194 : vector<1x104xi1> to vector<1x104xi1>
    %196 = vector.broadcast %195 : vector<1x104xi1> to vector<5x104xi1>
    %197 = arith.select %196, %43, %44 : vector<5x104xi1>, vector<5x104xf32>
    %198 = arith.select %194, %119, %193 : vector<1x104xi1>, vector<1x104xf32>
    %199 = vector.extract_strided_slice %44 {offsets = [4, 0], sizes = [1, 104], strides = [1, 1]} : vector<5x104xf32> to vector<1x104xf32>
    %200 = vector.extract_strided_slice %43 {offsets = [4, 0], sizes = [1, 104], strides = [1, 1]} : vector<5x104xf32> to vector<1x104xf32>
    %201 = arith.select %194, %199, %200 : vector<1x104xi1>, vector<1x104xf32>
    %202 = vector.extract_strided_slice %3 {offsets = [0, 0], sizes = [1, 104], strides = [1, 1]} : vector<30x104xf32> to vector<1x104xf32>
    %203 = vector.extract_strided_slice %197 {offsets = [0, 0], sizes = [1, 104], strides = [1, 1]} : vector<5x104xf32> to vector<1x104xf32>
    %204 = arith.subf %202, %203 : vector<1x104xf32>
    %205 = arith.mulf %204, %204 : vector<1x104xf32>
    %206 = vector.extract_strided_slice %3 {offsets = [1, 0], sizes = [1, 104], strides = [1, 1]} : vector<30x104xf32> to vector<1x104xf32>
    %207 = vector.extract_strided_slice %197 {offsets = [1, 0], sizes = [1, 104], strides = [1, 1]} : vector<5x104xf32> to vector<1x104xf32>
    %208 = arith.subf %206, %207 : vector<1x104xf32>
    %209 = arith.mulf %208, %208 : vector<1x104xf32>
    %210 = arith.addf %205, %209 : vector<1x104xf32>
    %211 = vector.extract_strided_slice %3 {offsets = [2, 0], sizes = [1, 104], strides = [1, 1]} : vector<30x104xf32> to vector<1x104xf32>
    %cst_48 = arith.constant 9.99999993E-9 : f32
    %212 = vector.broadcast %cst_48 : f32 to vector<1x104xf32>
    %213 = arith.addf %211, %212 : vector<1x104xf32>
    %214 = math.sqrt %213 : vector<1x104xf32>
    %215 = vector.extract_strided_slice %197 {offsets = [2, 0], sizes = [1, 104], strides = [1, 1]} : vector<5x104xf32> to vector<1x104xf32>
    %cst_49 = arith.constant 9.99999993E-9 : f32
    %216 = vector.broadcast %cst_49 : f32 to vector<1x104xf32>
    %217 = arith.addf %215, %216 : vector<1x104xf32>
    %218 = math.sqrt %217 : vector<1x104xf32>
    %219 = arith.subf %214, %218 : vector<1x104xf32>
    %220 = arith.mulf %219, %219 : vector<1x104xf32>
    %221 = arith.addf %210, %220 : vector<1x104xf32>
    %222 = vector.extract_strided_slice %3 {offsets = [3, 0], sizes = [1, 104], strides = [1, 1]} : vector<30x104xf32> to vector<1x104xf32>
    %cst_50 = arith.constant 9.99999993E-9 : f32
    %223 = vector.broadcast %cst_50 : f32 to vector<1x104xf32>
    %224 = arith.addf %222, %223 : vector<1x104xf32>
    %225 = math.sqrt %224 : vector<1x104xf32>
    %226 = vector.extract_strided_slice %197 {offsets = [3, 0], sizes = [1, 104], strides = [1, 1]} : vector<5x104xf32> to vector<1x104xf32>
    %cst_51 = arith.constant 9.99999993E-9 : f32
    %227 = vector.broadcast %cst_51 : f32 to vector<1x104xf32>
    %228 = arith.addf %226, %227 : vector<1x104xf32>
    %229 = math.sqrt %228 : vector<1x104xf32>
    %230 = arith.subf %225, %229 : vector<1x104xf32>
    %231 = arith.mulf %230, %230 : vector<1x104xf32>
    %232 = arith.addf %221, %231 : vector<1x104xf32>
    %cst_52 = arith.constant 5.000000e+00 : f32
    %233 = vector.broadcast %cst_52 : f32 to vector<1x104xf32>
    %234 = arith.mulf %233, %232 : vector<1x104xf32>
    %235 = vector.extract_strided_slice %197 {offsets = [4, 0], sizes = [1, 104], strides = [1, 1]} : vector<5x104xf32> to vector<1x104xf32>
    %236 = arith.subf %235, %198 : vector<1x104xf32>
    %237 = arith.mulf %236, %236 : vector<1x104xf32>
    %238 = vector.extract_strided_slice %3 {offsets = [10, 0], sizes = [20, 104], strides = [1, 1]} : vector<30x104xf32> to vector<20x104xf32>
    %239 = arith.subf %238, %45 : vector<20x104xf32>
    %240 = arith.mulf %239, %239 : vector<20x104xf32>
    %cst_53 = arith.constant dense<0.000000e+00> : vector<104xf32>
    %241 = vector.multi_reduction <add>, %240, %cst_53 [0] : vector<20x104xf32> to vector<104xf32>
    %242 = vector.shape_cast %241 : vector<104xf32> to vector<1x104xf32>
    %cst_54 = arith.constant 2.000000e+01 : f32
    %243 = vector.broadcast %cst_54 : f32 to vector<1x104xf32>
    %244 = arith.divf %242, %243 : vector<1x104xf32>
    %245 = arith.mulf %201, %201 : vector<1x104xf32>
    %cst_55 = arith.constant 5.000000e-01 : f32
    %246 = vector.broadcast %cst_55 : f32 to vector<1x104xf32>
    %247 = arith.mulf %246, %245 : vector<1x104xf32>
    %248 = vector.extract_strided_slice %3 {offsets = [9, 0], sizes = [1, 104], strides = [1, 1]} : vector<30x104xf32> to vector<1x104xf32>
    %249 = math.roundeven %248 : vector<1x104xf32>
    %cst_56 = arith.constant 0.000000e+00 : f32
    %250 = vector.broadcast %cst_56 : f32 to vector<1x104xf32>
    %251 = arith.cmpf one, %249, %250 : vector<1x104xf32>
    %252 = vector.extract_strided_slice %43 {offsets = [4, 0], sizes = [1, 104], strides = [1, 1]} : vector<5x104xf32> to vector<1x104xf32>
    %253 = vector.extract_strided_slice %44 {offsets = [4, 0], sizes = [1, 104], strides = [1, 1]} : vector<5x104xf32> to vector<1x104xf32>
    %254 = arith.mulf %252, %252 : vector<1x104xf32>
    %cst_57 = arith.constant 5.000000e-01 : f32
    %255 = vector.broadcast %cst_57 : f32 to vector<1x104xf32>
    %256 = arith.mulf %255, %254 : vector<1x104xf32>
    %257 = arith.mulf %253, %253 : vector<1x104xf32>
    %258 = arith.addf %256, %257 : vector<1x104xf32>
    %259 = arith.addf %234, %237 : vector<1x104xf32>
    %260 = arith.addf %259, %244 : vector<1x104xf32>
    %261 = arith.addf %260, %247 : vector<1x104xf32>
    %cst_58 = arith.constant 0.000000e+00 : f32
    %262 = vector.broadcast %cst_58 : f32 to vector<1x104xf32>
    %263 = arith.select %251, %261, %258 : vector<1x104xi1>, vector<1x104xf32>
    %264 = arith.select %251, %234, %262 : vector<1x104xi1>, vector<1x104xf32>
    %265 = arith.mulf %201, %201 : vector<1x104xf32>
    %266 = arith.addf %237, %265 : vector<1x104xf32>
    %267 = arith.select %251, %266, %258 : vector<1x104xi1>, vector<1x104xf32>
    %268 = arith.select %251, %244, %262 : vector<1x104xi1>, vector<1x104xf32>
    %269 = arith.select %251, %198, %262 : vector<1x104xi1>, vector<1x104xf32>
    %270 = arith.extui %251 : vector<1x104xi1> to vector<1x104xi32>
    %271 = arith.sitofp %270 : vector<1x104xi32> to vector<1x104xf32>
    %272 = tpu.concatenate %263, %264, %267, %268, %269, %271, %262, %262 in 0 : vector<1x104xf32>, vector<1x104xf32>, vector<1x104xf32>, vector<1x104xf32>, vector<1x104xf32>, vector<1x104xf32>, vector<1x104xf32>, vector<1x104xf32> -> vector<8x104xf32>
    %cst_59 = arith.constant dense<0.000000e+00> : vector<8xf32>
    %273 = vector.multi_reduction <add>, %272, %cst_59 [1] : vector<8x104xf32> to vector<8xf32>
    %274 = vector.shape_cast %273 : vector<8xf32> to vector<8x1xf32>
    %275 = vector.shape_cast %274 : vector<8x1xf32> to vector<8x1xf32>
    %276 = vector.broadcast %275 : vector<8x1xf32> to vector<8x128xf32>
    %c0_60 = arith.constant 0 : index
    %c0_61 = arith.constant 0 : index
    %c0_62 = arith.constant 0 : index
    %277 = vector.load %arg3[%c0_60, %c0_61, %c0_62] : memref<1x8x128xf32, #tpu.memory_space<vmem>>, vector<1x8x128xf32>
    %278 = vector.shape_cast %277 : vector<1x8x128xf32> to vector<8x128xf32>
    %279 = vector.shape_cast %276 : vector<8x128xf32> to vector<1x8x128xf32>
    tpu.vector_store %arg3[%c0_60, %c0_61, %c0_62], %279 {strides = array<i32>} : memref<1x8x128xf32, #tpu.memory_space<vmem>>, vector<1x8x128xf32>,
    return
  }
  func.func @transform_0(%arg0: i32) -> (i32, i32) {
    %c0_i32 = arith.constant 0 : i32
    %c0_i32_0 = arith.constant 0 : i32
    return %arg0, %c0_i32 : i32, i32
  }
  func.func @transform_1(%arg0: i32) -> (i32, i32) {
    %c0_i32 = arith.constant 0 : i32
    %c0_i32_0 = arith.constant 0 : i32
    return %arg0, %c0_i32 : i32, i32
  }
  func.func @transform_2(%arg0: i32) -> (i32, i32, i32) {
    %c0_i32 = arith.constant 0 : i32
    %c0_i32_0 = arith.constant 0 : i32
    %c0_i32_1 = arith.constant 0 : i32
    return %arg0, %c0_i32, %c0_i32_0 : i32, i32, i32
  }
}

</mosaic_0001>

<llo_original>
// kernel: tpu_custom_call.1
$region0: #{tpu_custom_call.1}
  #allocation0 [shape = 'u32[]', space=smem, size = 0x4, offset = 0x4, fixed_abs, tag = 'smem constant byte address 0x4 - core index']
  #allocation1 [shape = 'u32[144,128]{1,0:T(1,128)}', space=vmem, size = 0x12000, scoped, tag = 'internal scratch']
  %s0 = inlined_call_operand.vmem [shape: f32[104,30], index: 0, kind: input, shape index: {}]
  %s1 = inlined_call_operand.vmem [shape: f32[104,30], index: 1, kind: input, shape index: {}]
  %s2 = inlined_call_operand.hbm [shape: f32[1,8,128], index: 2, kind: output, shape index: {}]
  %s3 = sld [smem:[#allocation0]]
  $region18: #{tpu_custom_call.1} parent=0
    _
  %s5 = ssub.s32 1, %s3
  %s6 = scalar_select 0, %s5, %s3
  $region1: #{tpu_custom_call.1} parent=0
    #allocation2 [shape = 'u8[4096]{0}', space=vmem, size = 0x1000, scoped, tag = 'output window, operand 0, single buffered']
    #allocation3 [shape = 's32[1]{0}', space=sflag, size = 0x4, scoped, tag = 'scoped memory for tpu_custom_call.1']
    %7 = vsyncpa [#allocation3], 0
    // Predicated region
    $region2: #{tpu_custom_call.1} parent=1 // pred_check
      _
    $region3: #{tpu_custom_call.1} parent=1 // pred_check_branch
      %9 = sbr.rel (0) target = $region5
    $region4: #{tpu_custom_call.1} parent=1 // pred_region
      _
    $region5: #{tpu_custom_call.1} parent=1 // pred_fallthru
      _
    // Predicated region
    $region6: #{tpu_custom_call.1} parent=1 // pred_check
      _
    $region7: #{tpu_custom_call.1} parent=1 // pred_check_branch
      %11 = sbr.rel (0) target = $region9
    $region8: #{tpu_custom_call.1} parent=1 // pred_region
      _
    $region9: #{tpu_custom_call.1} parent=1 // pred_fallthru
      _
    %v12 = vld [vmem:[%s0] sm:$0xff]
    %v13 = vld [vmem:[%s0 + $0x8] sm:$0xff]
    %v14 = vld [vmem:[%s0 + $0x10] sm:$0xff]
    %v15 = vld [vmem:[%s0 + $0x18] sm:$0xff]
    %v16 = vld [vmem:[%s0 + $0x20] sm:$0xff]
    %v17 = vld [vmem:[%s0 + $0x28] sm:$0xff]
    %v18 = vld [vmem:[%s0 + $0x30] sm:$0xff]
    %v19 = vld [vmem:[%s0 + $0x38] sm:$0xff]
    %v20 = vld [vmem:[%s0 + $0x40] sm:$0xff]
    %v21 = vld [vmem:[%s0 + $0x48] sm:$0xff]
    %v22 = vld [vmem:[%s0 + $0x50] sm:$0xff]
    %v23 = vld [vmem:[%s0 + $0x58] sm:$0xff]
    %v24 = vld [vmem:[%s0 + $0x60] sm:$0xff]
    %25 = vxpose.xlu0.b32.start [1/16] %v12, 128
    %26 = vxpose.xlu0.b32.cont [2/16] %v13, 128
    %27 = vxpose.xlu0.b32.cont [3/16] %v14, 128
    %28 = vxpose.xlu0.b32.cont [4/16] %v15, 128
    %29 = vxpose.xlu0.b32.cont [5/16] %v16, 128
    %30 = vxpose.xlu0.b32.cont [6/16] %v17, 128
    %31 = vxpose.xlu0.b32.cont [7/16] %v18, 128
    %32 = vxpose.xlu0.b32.cont [8/16] %v19, 128
    %33 = vxpose.xlu0.b32.cont [9/16] %v20, 128
    %34 = vxpose.xlu0.b32.cont [10/16] %v21, 128
    %35 = vxpose.xlu0.b32.cont [11/16] %v22, 128
    %36 = vxpose.xlu0.b32.cont [12/16] %v23, 128
    %37 = vxpose.xlu0.b32.cont [13/16] %v24, 128
    %38 = vxpose.xlu0.b32.cont [14/16] 0.0, 128
    %39 = vxpose.xlu0.b32.cont [15/16] 0.0, 128
    %40 = vxpose.xlu0.b32.end [16/16] 0.0, 128
    %v41 = vpop.trf.xlu0
    %v42 = vpop.trf.xlu0
    %v43 = vpop.trf.xlu0
    %v44 = vpop.trf.xlu0
    %v45 = vpop.trf.xlu0
    %v46 = vpop.trf.xlu0
    %v47 = vpop.trf.xlu0
    %v48 = vpop.trf.xlu0
    %v49 = vpop.trf.xlu0
    %v50 = vpop.trf.xlu0
    %v51 = vpop.trf.xlu0
    %v52 = vpop.trf.xlu0
    %v53 = vpop.trf.xlu0
    %v54 = vpop.trf.xlu0
    %v55 = vpop.trf.xlu0
    %v56 = vpop.trf.xlu0
    %v57 = vld [vmem:[%s1] sm:$0xff]
    %v58 = vld [vmem:[%s1 + $0x8] sm:$0xff]
    %v59 = vld [vmem:[%s1 + $0x10] sm:$0xff]
    %v60 = vld [vmem:[%s1 + $0x18] sm:$0xff]
    %v61 = vld [vmem:[%s1 + $0x20] sm:$0xff]
    %v62 = vld [vmem:[%s1 + $0x28] sm:$0xff]
    %v63 = vld [vmem:[%s1 + $0x30] sm:$0xff]
    %v64 = vld [vmem:[%s1 + $0x38] sm:$0xff]
    %v65 = vld [vmem:[%s1 + $0x40] sm:$0xff]
    %v66 = vld [vmem:[%s1 + $0x48] sm:$0xff]
    %v67 = vld [vmem:[%s1 + $0x50] sm:$0xff]
    %v68 = vld [vmem:[%s1 + $0x58] sm:$0xff]
    %v69 = vld [vmem:[%s1 + $0x60] sm:$0xff]
    %70 = vxpose.xlu0.b32.start [1/16] %v57, 128
    %71 = vxpose.xlu0.b32.cont [2/16] %v58, 128
    %72 = vxpose.xlu0.b32.cont [3/16] %v59, 128
    %73 = vxpose.xlu0.b32.cont [4/16] %v60, 128
    %74 = vxpose.xlu0.b32.cont [5/16] %v61, 128
    %75 = vxpose.xlu0.b32.cont [6/16] %v62, 128
    %76 = vxpose.xlu0.b32.cont [7/16] %v63, 128
    %77 = vxpose.xlu0.b32.cont [8/16] %v64, 128
    %78 = vxpose.xlu0.b32.cont [9/16] %v65, 128
    %79 = vxpose.xlu0.b32.cont [10/16] %v66, 128
    %80 = vxpose.xlu0.b32.cont [11/16] %v67, 128
    %81 = vxpose.xlu0.b32.cont [12/16] %v68, 128
    %82 = vxpose.xlu0.b32.cont [13/16] %v69, 128
    %83 = vxpose.xlu0.b32.cont [14/16] 0.0, 128
    %84 = vxpose.xlu0.b32.cont [15/16] 0.0, 128
    %85 = vxpose.xlu0.b32.end [16/16] 0.0, 128
    %v86 = vpop.trf.xlu0
    %v87 = vpop.trf.xlu0
    %v88 = vpop.trf.xlu0
    %v89 = vpop.trf.xlu0
    %v90 = vpop.trf.xlu0
    %v91 = vpop.trf.xlu0
    %v92 = vpop.trf.xlu0
    %v93 = vpop.trf.xlu0
    %v94 = vpop.trf.xlu0
    %v95 = vpop.trf.xlu0
    %v96 = vpop.trf.xlu0
    %v97 = vpop.trf.xlu0
    %v98 = vpop.trf.xlu0
    %v99 = vpop.trf.xlu0
    %v100 = vpop.trf.xlu0
    %v101 = vpop.trf.xlu0
    %v102 = vlaneseq
    %v103 = vand.u32 %v102, 127
    %v104 = vcvt.s32.f32 %v103
    %s105 = smul.u32 0, 104
    %s106 = scvt.s32.f32 %s105
    %v107 = vstv %s106
    %v108 = vadd.f32 %v104, %v107
    %v109 = vrcp.pop 49.0
    %v110 = vmul.f32 %v108, %v109
    %v111 = vfloor.f32 %v110
    %v112 = vmul.f32 %v111, 49.0
    %v113 = vsub.f32 %v108, %v112
    %vm114 = vcmp.lt.f32.partialorder %v113, 0.0
    %v115 = vadd.f32 %v113, 49.0
    %v116 = vsel %vm114, %v115, %v113
    %vm117 = vcmp.ge.f32.partialorder %v116, 49.0
    %v118 = vsub.f32 %v116, 49.0
    %v119 = vsel %vm117, %v118, %v116
    %v120 = vrcp.pop 7.0
    %v121 = vmul.f32 %v119, %v120
    %v122 = vfloor.f32 %v121
    %v123 = vmul.f32 %v122, 7.0
    %v124 = vsub.f32 %v119, %v123
    %v125 = vmul.f32 %v124, 64.0
    %v126 = vmul.f32 %v122, 64.0
    %v128 = vrot.slane %v86, 6
    %v130 = vsub.f32 %v86, %v128
    %v131 = vsub.f32 %v87, %v128
    %v133 = vrot.slane %v131, 1
    %v135 = vmul.f32 %v130, %v133
    %v136 = vmul.f32 %v41, 64.0
    %v137 = vadd.f32 %v125, %v136
    %vm138 = vcmp.ge.f32.partialorder %v137, 0.0
    %v139 = vfloor.f32 %v137
    %v140 = vceil.f32 %v137
    %v141 = vsel %vm138, %v139, %v140
    %v142 = vadd.f32 %v126, %v136
    %vm143 = vcmp.ge.f32.partialorder %v142, 0.0
    %v144 = vfloor.f32 %v142
    %v145 = vceil.f32 %v142
    %v146 = vsel %vm143, %v144, %v145
    %v147 = vmul.f32 %v41, 448.0
    %vm148 = vcmp.ge.f32.partialorder %v147, 0.0
    %v149 = vfloor.f32 %v147
    %v150 = vceil.f32 %v147
    %v151 = vsel %vm148, %v149, %v150
    %v152 = vmul.f32 %v151, 0.5
    %v154 = vrot.slane %v152, 2
    %v156 = vsub.f32 %v141, %v154
    %v157 = vmax.f32 %v156, 0.0
    %v158 = vsub.f32 %v146, %v154
    %v159 = vmax.f32 %v158, 0.0
    %v160 = vadd.f32 %v141, %v154
    %v161 = vmin.f32 %v160, 447.0
    %v162 = vadd.f32 %v146, %v154
    %v163 = vmin.f32 %v162, 447.0
    %v164 = vsub.f32 %v161, %v157
    %v165 = vsub.f32 %v163, %v159
    %v167 = vrot.slane %v165, 1
    %v169 = vmul.f32 %v164, %v167
    %v170 = vrot.slane %v86, 5
    %v172 = vmax.f32 %v157, %v170
    %v173 = vrot.slane %v86, 7
    %v175 = vmin.f32 %v161, %v173
    %v176 = vmax.f32 %v159, %v170
    %v178 = vrot.slane %v87, 7
    %v180 = vmin.f32 %v163, %v178
    %v181 = vsub.f32 %v175, %v172
    %v182 = vsub.f32 %v180, %v176
    %v184 = vrot.slane %v182, 1
    %v186 = vmul.f32 %v181, %v184
    %v188 = vrot.slane %v135, 7
    %v190 = vadd.f32 %v169, %v188
    %v191 = vsub.f32 %v190, %v186
    %vm192 = vcmp.lt.f32.partialorder %v175, %v172
    %vm193 = vcmp.lt.f32.partialorder %v180, %v176
    %v194 = vsel %vm193, 1, 0
    %v195 = vrot.slane %v194, 1
    %vm196 = vcmp.ne.s32.totalorder %v195, 0
    %vm197 = vmor %vm192, %vm196
    %v198 = vsel %vm197, 1.0, %v191
    %v199 = vrcp.pop %v198
    %v200 = vmul.f32 %v186, %v199
    %v201 = vsel %vm197, 0.0, %v200
    %v202 = vmul.f32 %v42, 448.0
    %vm203 = vcmp.ge.f32.partialorder %v202, 0.0
    %v204 = vfloor.f32 %v202
    %v205 = vceil.f32 %v202
    %v206 = vsel %vm203, %v204, %v205
    %v207 = vmul.f32 %v206, 0.5
    %v209 = vrot.slane %v207, 2
    %v211 = vsub.f32 %v146, %v209
    %v212 = vmax.f32 %v211, 0.0
    %v213 = vadd.f32 %v146, %v209
    %v214 = vmin.f32 %v213, 447.0
    %v215 = vsub.f32 %v214, %v212
    %v217 = vrot.slane %v215, 1
    %v219 = vmul.f32 %v164, %v217
    %v220 = vmax.f32 %v157, %v86
    %v221 = vrot.slane %v86, 2
    %v223 = vmin.f32 %v161, %v221
    %v224 = vmax.f32 %v212, %v86
    %v225 = vrot.slane %v87, 2
    %v227 = vmin.f32 %v214, %v225
    %v228 = vsub.f32 %v223, %v220
    %v229 = vsub.f32 %v227, %v224
    %v231 = vrot.slane %v229, 1
    %v233 = vmul.f32 %v228, %v231
    %v234 = vrot.slane %v135, 2
    %v236 = vadd.f32 %v219, %v234
    %v237 = vsub.f32 %v236, %v233
    %vm238 = vcmp.lt.f32.partialorder %v223, %v220
    %vm239 = vcmp.lt.f32.partialorder %v227, %v224
    %v240 = vsel %vm239, 1, 0
    %v241 = vrot.slane %v240, 1
    %vm242 = vcmp.ne.s32.totalorder %v241, 0
    %vm243 = vmor %vm238, %vm242
    %v244 = vsel %vm243, 1.0, %v237
    %v245 = vrcp.pop %v244
    %v246 = vmul.f32 %v233, %v245
    %v247 = vsel %vm243, 0.0, %v246
    %v249 = vrot.slane %v247, 5
    %vm251 = vcmp.gt.f32.partialorder %v201, %v249
    %v252 = vsel %vm251, 1, 0
    %v253 = vlaneseq
    %v254 = vshrl.u32 %v253, 7
    %v255 = vsub.s32 0, %v254
    %v256 = vrot.slane %v252, %v255
    %vm257 = vcmp.eq.s32.totalorder %v256, 1
    %vm260 = vcmask 1042432
    %v261 = vrot.slane %v41, 5
    %v262 = vrot.slane %v42, 5
    %v263 = vsel %vm260, %v261, %v262
    %v265 = vsel %vm257, %v41, %v263
    %v266 = vsel %vm251, %v201, %v249
    %v267 = vrot.slane %v42, 1
    %v269 = vrot.slane %v41, 4
    %v271 = vsel %vm251, %v267, %v269
    %v272 = vsub.f32 %v86, %v265
    %v273 = vmul.f32 %v272, %v272
    %v275 = vrot.slane %v273, 1
    %v277 = vadd.f32 %v273, %v275
    %v278 = vadd.f32 %v86, 1e-08
    %v279 = vrsqrt.pop %v278
    %v280 = vmul.f32 %v278, %v279
    %vm281 = vcmp.eq.f32.partialorder %v278, inf
    %v282 = vsel %vm281, %v278, %v280
    %vm283 = vcmp.eq.f32.partialorder %v278, 0.0
    %v284 = vand.u32 %v278, 2147483648
    %v285 = vsel %vm283, %v284, %v282
    %v286 = vadd.f32 %v265, 1e-08
    %v287 = vrsqrt.pop %v286
    %v288 = vmul.f32 %v286, %v287
    %vm289 = vcmp.eq.f32.partialorder %v286, inf
    %v290 = vsel %vm289, %v286, %v288
    %vm291 = vcmp.eq.f32.partialorder %v286, 0.0
    %v292 = vand.u32 %v286, 2147483648
    %v293 = vsel %vm291, %v292, %v290
    %v294 = vsub.f32 %v285, %v293
    %v295 = vmul.f32 %v294, %v294
    %v297 = vrot.slane %v295, 2
    %v299 = vadd.f32 %v277, %v297
    %v300 = vrot.slane %v295, 3
    %v302 = vadd.f32 %v299, %v300
    %v303 = vmul.f32 %v302, 5.0
    %v305 = vrot.slane %v266, 4
    %v307 = vsub.f32 %v265, %v305
    %v308 = vmul.f32 %v307, %v307
    %v309 = vsub.f32 %v87, %v42
    %v310 = vsub.f32 %v88, %v43
    %v311 = vsub.f32 %v89, %v44
    %v312 = vmul.f32 %v309, %v309
    %v313 = vmul.f32 %v310, %v310
    %v314 = vmul.f32 %v311, %v311
    %vm318 = vcmask 1045504
    %v319 = vrot.slane %v312, 2
    %v320 = vrot.slane %v313, 2
    %v321 = vsel %vm318, %v319, %v320
    %v322 = vrot.slane %v314, 2
    %v323 = vsel %vm318, %v320, %v322
    %vm327 = vcmask 850944
    %v328 = vsel %vm327, %v321, 0.0
    %v329 = vsel %vm327, %v323, 0.0
    %v330 = vadd.f32 %v328, %v329
    %vm331 = vcmask 846848
    %v332 = vsel %vm331, %v322, 0.0
    %v333 = vadd.f32 %v330, %v332
    %v334 = vrot.slane %v333, 4
    %v335 = vadd.f32 %v333, %v334
    %v336 = vrot.slane %v335, 2
    %v337 = vadd.f32 %v335, %v336
    %v338 = vrot.slane %v337, 1
    %v339 = vadd.f32 %v337, %v338
    %v340 = vrcp.pop 20.0
    %v341 = vmul.f32 %v339, %v340
    %v342 = vmul.f32 %v271, %v271
    %v343 = vmul.f32 %v342, 0.5
    %v344 = vround.ne.pseudo %v87
    %vm345 = vcmp.ne.f32.partialorder %v344, 0.0
    %v346 = vmul.f32 %v41, %v41
    %v347 = vmul.f32 %v346, 0.5
    %v348 = vmul.f32 %v42, %v42
    %v350 = vrot.slane %v348, 5
    %v352 = vadd.f32 %v347, %v350
    %v354 = vrot.slane %v308, 4
    %v356 = vadd.f32 %v303, %v354
    %v357 = vadd.f32 %v356, %v341
    %v358 = vadd.f32 %v357, %v343
    %v360 = vrot.slane %v358, 7
    %v363 = vrot.slane %v352, 3
    %v365 = vsel %vm345, %v360, %v363
    %v367 = vrot.slane %v303, 7
    %v369 = vsel %vm345, %v367, 0.0
    %v371 = vrot.slane %v342, 4
    %v373 = vadd.f32 %v308, %v371
    %v375 = vrot.slane %v373, 3
    %v377 = vsel %vm345, %v375, %v363
    %v378 = vsel %vm345, %v341, 0.0
    %v379 = vrot.slane %v266, 7
    %v381 = vsel %vm345, %v379, 0.0
    %v382 = vsel %vm345, 1, 0
    %v383 = vcvt.s32.f32 %v382
    %v385 = vrot.slane %v365, 1
    %v388 = vrot.slane %v377, 7
    %v391 = vrot.slane %v378, 6
    %v394 = vrot.slane %v381, 5
    %v397 = vrot.slane %v383, 4
    %vm399 = vcmask 1040384
    %v400 = vsel %vm399, %v385, %v369
    %vm401 = vcmask 1041408
    %v402 = vsel %vm401, %v400, %v388
    %v403 = vsel %vm260, %v402, %v391
    %vm404 = vcmask 1043456
    %v405 = vsel %vm404, %v403, %v394
    %vm406 = vcmask 1044480
    %v407 = vsel %vm406, %v405, %v397
    %v408 = vsel %vm318, %v407, 0.0
    %vm409 = vcmask 1046528
    %v410 = vsel %vm409, %v408, 0.0
    %v411 = vsel %vm327, %v410, 0.0
    %412 = vadd.xlane.f32.xlu0 %v411
    %v413 = vpop.xlane.xlu0 %412
    %414 = vst [vmem:[#allocation2] sm:$0xff] %v413
    // Predicated region
    $region10: #{tpu_custom_call.1} parent=1 // pred_check
      _
    $region11: #{tpu_custom_call.1} parent=1 // pred_check_branch
      %416 = sbr.rel (0) target = $region13
    $region12: #{tpu_custom_call.1} parent=1 // pred_region
      %s418 = ssub.s32 128, 128
      %419 = vsyncadd [#allocation3], %s418
      %s421 = sshll.u32 [#allocation2], 4
      %s422 = int_to_ptr.vmem [resolvable:$true] %s421
      %424 = dma.vmem_to_hbm [thread:$0]  %s422, 128, %s2, [#allocation3]
    $region13: #{tpu_custom_call.1} parent=1 // pred_fallthru
      _
    // Predicated region
    $region14: #{tpu_custom_call.1} parent=1 // pred_check
      _
    $region15: #{tpu_custom_call.1} parent=1 // pred_check_branch
      %426 = sbr.rel (0) target = $region17
    $region16: #{tpu_custom_call.1} parent=1 // pred_region
      %427 = dma.done [#allocation3], 128
    $region17: #{tpu_custom_call.1} parent=1 // pred_fallthru
      _
    %428 = vsyncpa [#allocation3], 1

</llo_original>
